<compile_context>
chip_gen: v5e
topology: v5e:2x2
jax: 0.10.0
libtpu: 0.0.40
codegen_flags: <defaults>
</compile_context>

<pallas_src>
import jax
import jax.numpy as jnp
from jax.experimental import pallas as pl
from jax.experimental.pallas import tpu as pltpu


def _round_up(n, m):
    return -(-n // m) * m


def _pad_last_to(a, target):
    pad = target - a.shape[-1]
    if pad == 0:
        return a
    widths = [(0, 0)] * (a.ndim - 1) + [(0, pad)]
    return jnp.pad(a, widths)


def _vmem_capacity_bytes():
    try:
        return int(pltpu.get_tpu_info().vmem_capacity_bytes)
    except Exception:
        return 64 << 20  # conservative default (v7x per-TensorCore VMEM)


def _spectral_vpu_kernel(xr_ref, xi_ref, wr_ref, wi_ref, or_ref, oi_ref):
    """Lane-dense complex channel contraction on the VPU.

    Block shapes (corner grid dim squeezed away by the BlockSpec):
      xr/xi : (B, Cin, tm)     real / imag parts of the selected Fourier modes of x
      wr/wi : (Cin, Cout, tm)  real / imag parts of the weights
      or/oi : (B, Cout, tm)    out[b,o,m] = sum_i x[b,i,m] * w[i,o,m]   (complex)

    The mode axis tm sits on the lane dimension, so every multiply/add is a dense
    full-width vreg op and the output store is an unmasked vst.  The Cin reduction is
    an unrolled FMA chain (schoolbook 4-multiply complex product).
    """
    cin = xr_ref.shape[1]
    acc_r = None
    acc_i = None
    for i in range(cin):  # statically unrolled (small channel counts)
        xr_i = xr_ref[:, i, :][:, None, :]   # (B, 1, tm)
        xi_i = xi_ref[:, i, :][:, None, :]
        wr_i = wr_ref[i][None, :, :]          # (1, Cout, tm)
        wi_i = wi_ref[i][None, :, :]
        tr = xr_i * wr_i - xi_i * wi_i        # (B, Cout, tm)
        ti = xr_i * wi_i + xi_i * wr_i
        acc_r = tr if acc_r is None else acc_r + tr
        acc_i = ti if acc_i is None else acc_i + ti
    or_ref[...] = acc_r
    oi_ref[...] = acc_i


def _select_mode_tile(M, B, Cin, Cout, vmem_cap):
    """Pick the mode-block size tm (lane axis) and the padded mode extent Mp."""
    # f32 * (re+im) * double-buffered pipeline, per mode column, for x + w + out blocks.
    per_mode = 4 * 2 * 2 * (B * Cin + Cin * Cout + B * Cout)
    budget = vmem_cap // 3   # leave room for pipeline overheads / compiler scratch
    if M <= 128:
        return M, M, per_mode
    tm_cap = max(128, (budget // per_mode) // 128 * 128)
    tm = int(min(tm_cap, _round_up(M, 128)))
    Mp = _round_up(M, tm)
    return tm, Mp, per_mode


def _spectral_contract(x_corners, w_corners):
    """einsum('bixy,ioxy->boxy') for complex inputs, fused over the 4 corners.

    x_corners: (4, B, Cin, m1, m2) complex64
    w_corners: (4, Cin, Cout, m1, m2) complex64
    returns    (4, B, Cout, m1, m2) complex64
    """
    n_corner, B, Cin, m1, m2 = x_corners.shape
    Cout = w_corners.shape[2]
    M = m1 * m2

    # Natural layouts with the flattened mode axis last (contiguous reshape, no transpose).
    xr = jnp.real(x_corners).astype(jnp.float32).reshape(n_corner, B, Cin, M)
    xi = jnp.imag(x_corners).astype(jnp.float32).reshape(n_corner, B, Cin, M)
    wr = jnp.real(w_corners).astype(jnp.float32).reshape(n_corner, Cin, Cout, M)
    wi = jnp.imag(w_corners).astype(jnp.float32).reshape(n_corner, Cin, Cout, M)

    vmem_cap = _vmem_capacity_bytes()
    tm, Mp, per_mode = _select_mode_tile(M, B, Cin, Cout, vmem_cap)

    # Zero-pad only the mode (lane) axis; padded modes contribute nothing and are sliced off.
    xr = _pad_last_to(xr, Mp)
    xi = _pad_last_to(xi, Mp)
    wr = _pad_last_to(wr, Mp)
    wi = _pad_last_to(wi, Mp)

    n_mblk = Mp // tm

    x_spec = pl.BlockSpec((None, B, Cin, tm), lambda c, mb: (c, 0, 0, mb))
    w_spec = pl.BlockSpec((None, Cin, Cout, tm), lambda c, mb: (c, 0, 0, mb))
    o_spec = pl.BlockSpec((None, B, Cout, tm), lambda c, mb: (c, 0, 0, mb))

    per_step_bytes = per_mode * tm
    vmem_limit = int(min(vmem_cap * 0.9, max(32 << 20, per_step_bytes + (8 << 20))))

    out_re, out_im = pl.pallas_call(
        _spectral_vpu_kernel,
        out_shape=(
            jax.ShapeDtypeStruct((n_corner, B, Cout, Mp), jnp.float32),
            jax.ShapeDtypeStruct((n_corner, B, Cout, Mp), jnp.float32),
        ),
        grid=(n_corner, n_mblk),
        in_specs=[x_spec, x_spec, w_spec, w_spec],
        out_specs=(o_spec, o_spec),
        compiler_params=pltpu.CompilerParams(
            dimension_semantics=("parallel", "parallel"),
            vmem_limit_bytes=vmem_limit),
    )(xr, xi, wr, wi)

    out = jax.lax.complex(out_re[..., :M], out_im[..., :M])
    return out.reshape(n_corner, B, Cout, m1, m2)


def _assemble_spectrum(top, bot, n_rows, n_cols):
    """Spectrum with `top` at rows [:m1], `bot` at rows [n_rows-m1:], cols [:m2]; zero elsewhere.

    Built with pad/concatenate instead of a full zeros() buffer + scatter updates.
    Requires 2*m1 <= n_rows (standard FNO setting, same as the reference).
    """
    b, c, m1, m2 = top.shape
    assert 2 * m1 <= n_rows, "SpectralConv2d_fast requires 2*modes1 <= spatial size"
    assert m2 <= n_cols, "SpectralConv2d_fast requires modes2 <= W//2 + 1"
    pad_cols = ((0, 0), (0, 0), (0, 0), (0, n_cols - m2))
    top = jnp.pad(top, pad_cols)
    bot = jnp.pad(bot, pad_cols)
    mid = jnp.zeros((b, c, n_rows - 2 * m1, n_cols), dtype=top.dtype)
    return jnp.concatenate([top, mid, bot], axis=2)


def spectral_conv2d_fast(x, w1, w2, w3, w4, modes1, modes2):
    """Forward pass of SpectralConv2d_fast.

    x: (B, Cin, H, W) float32 (NCHW)
    w1..w4: (Cin, Cout, modes1, modes2) complex64
    returns (out_x, out_z), each (B, Cout, H, W) float32
    """
    B, Cin, H, W = x.shape
    Wf = W // 2 + 1

    # TODO(synk): rfft2/irfft2 have no Pallas TPU equivalent; kept in plain JAX.
    x_ft_x = jnp.fft.rfft2(x)                         # (B, Cin, H, W//2+1)
    x_ft_z = jnp.fft.rfft2(jnp.swapaxes(x, 2, 3))     # (B, Cin, W, H//2+1)

    # Four corner mode slabs (mirrors the reference module exactly, including its
    # -modes1: slicing of the transposed branch).
    x_corners = jnp.stack(
        [
            x_ft_x[:, :, :modes1, :modes2],
            x_ft_x[:, :, H - modes1:, :modes2],
            x_ft_z[:, :, :modes1, :modes2],
            x_ft_z[:, :, W - modes1:, :modes2],
        ],
        axis=0,
    )                                                 # (4, B, Cin, m1, m2)
    w_corners = jnp.stack([w1, w2, w3, w4], axis=0)   # (4, Cin, Cout, m1, m2)

    out_corners = _spectral_contract(x_corners, w_corners)   # (4, B, Cout, m1, m2)

    out_ft_x = _assemble_spectrum(out_corners[0], out_corners[1], H, Wf)
    out_ft_z = _assemble_spectrum(out_corners[2], out_corners[3], H, Wf)

    out_x = jnp.fft.irfft2(out_ft_x, s=(H, W))
    out_z = jnp.fft.irfft2(out_ft_z, s=(H, W))
    return out_x, out_z


def init_weights(key, in_channels, out_channels, modes1, modes2):
    """Deterministic analogue of scale * torch.rand(..., dtype=cfloat)."""
    scale = 1.0 / (in_channels * out_channels * 1000)
    shape = (in_channels, out_channels, modes1, modes2)
    weights = []
    for k in jax.random.split(key, 4):
        kr, ki = jax.random.split(k)
        re = jax.random.uniform(kr, shape, dtype=jnp.float32)
        im = jax.random.uniform(ki, shape, dtype=jnp.float32)
        weights.append(jax.lax.complex(scale * re, scale * im).astype(jnp.complex64))
    return tuple(weights)


def _reference_forward(x, w1, w2, w3, w4, modes1, modes2):
    """Pure-JAX transcription of the PyTorch module (for the correctness check)."""
    B, Cin, H, W = x.shape
    Cout = w1.shape[1]
    mul = lambda a, w: jnp.einsum("bixy,ioxy->boxy", a, w)
    x_ft_x = jnp.fft.rfft2(x)
    x_ft_z = jnp.fft.rfft2(jnp.swapaxes(x, 2, 3))
    out_ft_x = jnp.zeros((B, Cout, H, W // 2 + 1), dtype=jnp.complex64)
    out_ft_z = jnp.zeros((B, Cout, H, W // 2 + 1), dtype=jnp.complex64)
    out_ft_x = out_ft_x.at[:, :, :modes1, :modes2].set(mul(x_ft_x[:, :, :modes1, :modes2], w1))
    out_ft_x = out_ft_x.at[:, :, H - modes1:, :modes2].set(mul(x_ft_x[:, :, H - modes1:, :modes2], w2))
    out_ft_z = out_ft_z.at[:, :, :modes1, :modes2].set(mul(x_ft_z[:, :, :modes1, :modes2], w3))
    out_ft_z = out_ft_z.at[:, :, H - modes1:, :modes2].set(mul(x_ft_z[:, :, W - modes1:, :modes2], w4))
    return jnp.fft.irfft2(out_ft_x, s=(H, W)), jnp.fft.irfft2(out_ft_z, s=(H, W))


if __name__ == "__main__":
    B, C_in, C_out, H, W = 2, 4, 4, 16, 16
    modes1, modes2 = 4, 4

    key = jax.random.PRNGKey(0)
    kx, kw = jax.random.split(key)
    x = jax.random.normal(kx, (B, C_in, H, W), dtype=jnp.float32)
    w1, w2, w3, w4 = init_weights(kw, C_in, C_out, modes1, modes2)

    fwd = jax.jit(spectral_conv2d_fast, static_argnums=(5, 6))
    out_x, out_z = fwd(x, w1, w2, w3, w4, modes1, modes2)
    jax.block_until_ready((out_x, out_z))

    assert out_x.shape == (B, C_out, H, W)
    assert out_z.shape == (B, C_out, H, W)

    # Correctness check against a pure-JAX transcription of the PyTorch module.
    ref_x, ref_z = _reference_forward(x, w1, w2, w3, w4, modes1, modes2)
    scale = float(jnp.maximum(jnp.max(jnp.abs(ref_x)), jnp.max(jnp.abs(ref_z)))) + 1e-12
    err = max(float(jnp.max(jnp.abs(out_x - ref_x))), float(jnp.max(jnp.abs(out_z - ref_z))))
    assert err / scale < 1e-2, f"mismatch vs reference: relative error {err / scale:.3e}"

    print("KERNEL_OK")
</pallas_src>

<mosaic_0001>
module attributes {stable_mosaic.version = 11 : i64} {
  func.func @_spectral_vpu_kernel(%arg0: i32, %arg1: i32, %arg2: memref<1x2x4x16xf32, #tpu.memory_space<vmem>>, %arg3: memref<1x2x4x16xf32, #tpu.memory_space<vmem>>, %arg4: memref<1x4x4x16xf32, #tpu.memory_space<vmem>>, %arg5: memref<1x4x4x16xf32, #tpu.memory_space<vmem>>, %arg6: memref<1x2x4x16xf32, #tpu.memory_space<vmem>>, %arg7: memref<1x2x4x16xf32, #tpu.memory_space<vmem>>) attributes {dimension_semantics = [#tpu.dimension_semantics<parallel>, #tpu.dimension_semantics<parallel>], iteration_bounds = array<i64: 4, 1>, scalar_prefetch = 0 : i64, scratch_operands = 0 : i64, tpu.core_type = #tpu.core_type<tc>, window_params = [{transform_indices = @transform_0, window_bounds = array<i64: 1, 2, 4, 16>}, {transform_indices = @transform_1, window_bounds = array<i64: 1, 2, 4, 16>}, {transform_indices = @transform_2, window_bounds = array<i64: 1, 4, 4, 16>}, {transform_indices = @transform_3, window_bounds = array<i64: 1, 4, 4, 16>}, {transform_indices = @transform_4, window_bounds = array<i64: 1, 2, 4, 16>}, {transform_indices = @transform_5, window_bounds = array<i64: 1, 2, 4, 16>}]} {
    %c0 = arith.constant 0 : index
    %c0_0 = arith.constant 0 : index
    %c0_1 = arith.constant 0 : index
    %c0_2 = arith.constant 0 : index
    %0 = vector.load %arg2[%c0, %c0_0, %c0_1, %c0_2] : memref<1x2x4x16xf32, #tpu.memory_space<vmem>>, vector<1x2x1x16xf32>
    %1 = vector.shape_cast %0 : vector<1x2x1x16xf32> to vector<2x16xf32>
    %2 = vector.shape_cast %1 : vector<2x16xf32> to vector<2x1x16xf32>
    %c0_3 = arith.constant 0 : index
    %c0_4 = arith.constant 0 : index
    %c0_5 = arith.constant 0 : index
    %c0_6 = arith.constant 0 : index
    %3 = vector.load %arg3[%c0_3, %c0_4, %c0_5, %c0_6] : memref<1x2x4x16xf32, #tpu.memory_space<vmem>>, vector<1x2x1x16xf32>
    %4 = vector.shape_cast %3 : vector<1x2x1x16xf32> to vector<2x16xf32>
    %5 = vector.shape_cast %4 : vector<2x16xf32> to vector<2x1x16xf32>
    %c0_7 = arith.constant 0 : index
    %c0_8 = arith.constant 0 : index
    %c0_9 = arith.constant 0 : index
    %c0_10 = arith.constant 0 : index
    %6 = vector.load %arg4[%c0_7, %c0_8, %c0_9, %c0_10] : memref<1x4x4x16xf32, #tpu.memory_space<vmem>>, vector<1x1x4x16xf32>
    %7 = vector.shape_cast %6 : vector<1x1x4x16xf32> to vector<4x16xf32>
    %8 = vector.shape_cast %7 : vector<4x16xf32> to vector<1x4x16xf32>
    %c0_11 = arith.constant 0 : index
    %c0_12 = arith.constant 0 : index
    %c0_13 = arith.constant 0 : index
    %c0_14 = arith.constant 0 : index
    %9 = vector.load %arg5[%c0_11, %c0_12, %c0_13, %c0_14] : memref<1x4x4x16xf32, #tpu.memory_space<vmem>>, vector<1x1x4x16xf32>
    %10 = vector.shape_cast %9 : vector<1x1x4x16xf32> to vector<4x16xf32>
    %11 = vector.shape_cast %10 : vector<4x16xf32> to vector<1x4x16xf32>
    %12 = vector.broadcast %2 : vector<2x1x16xf32> to vector<2x4x16xf32>
    %13 = vector.broadcast %8 : vector<1x4x16xf32> to vector<2x4x16xf32>
    %14 = arith.mulf %12, %13 : vector<2x4x16xf32>
    %15 = vector.broadcast %5 : vector<2x1x16xf32> to vector<2x4x16xf32>
    %16 = vector.broadcast %11 : vector<1x4x16xf32> to vector<2x4x16xf32>
    %17 = arith.mulf %15, %16 : vector<2x4x16xf32>
    %18 = arith.subf %14, %17 : vector<2x4x16xf32>
    %19 = vector.broadcast %2 : vector<2x1x16xf32> to vector<2x4x16xf32>
    %20 = vector.broadcast %11 : vector<1x4x16xf32> to vector<2x4x16xf32>
    %21 = arith.mulf %19, %20 : vector<2x4x16xf32>
    %22 = vector.broadcast %5 : vector<2x1x16xf32> to vector<2x4x16xf32>
    %23 = vector.broadcast %8 : vector<1x4x16xf32> to vector<2x4x16xf32>
    %24 = arith.mulf %22, %23 : vector<2x4x16xf32>
    %25 = arith.addf %21, %24 : vector<2x4x16xf32>
    %c0_15 = arith.constant 0 : index
    %c0_16 = arith.constant 0 : index
    %c1 = arith.constant 1 : index
    %c0_17 = arith.constant 0 : index
    %26 = vector.load %arg2[%c0_15, %c0_16, %c1, %c0_17] : memref<1x2x4x16xf32, #tpu.memory_space<vmem>>, vector<1x2x1x16xf32>
    %27 = vector.shape_cast %26 : vector<1x2x1x16xf32> to vector<2x16xf32>
    %28 = vector.shape_cast %27 : vector<2x16xf32> to vector<2x1x16xf32>
    %c0_18 = arith.constant 0 : index
    %c0_19 = arith.constant 0 : index
    %c1_20 = arith.constant 1 : index
    %c0_21 = arith.constant 0 : index
    %29 = vector.load %arg3[%c0_18, %c0_19, %c1_20, %c0_21] : memref<1x2x4x16xf32, #tpu.memory_space<vmem>>, vector<1x2x1x16xf32>
    %30 = vector.shape_cast %29 : vector<1x2x1x16xf32> to vector<2x16xf32>
    %31 = vector.shape_cast %30 : vector<2x16xf32> to vector<2x1x16xf32>
    %c0_22 = arith.constant 0 : index
    %c1_23 = arith.constant 1 : index
    %c0_24 = arith.constant 0 : index
    %c0_25 = arith.constant 0 : index
    %32 = vector.load %arg4[%c0_22, %c1_23, %c0_24, %c0_25] : memref<1x4x4x16xf32, #tpu.memory_space<vmem>>, vector<1x1x4x16xf32>
    %33 = vector.shape_cast %32 : vector<1x1x4x16xf32> to vector<4x16xf32>
    %34 = vector.shape_cast %33 : vector<4x16xf32> to vector<1x4x16xf32>
    %c0_26 = arith.constant 0 : index
    %c1_27 = arith.constant 1 : index
    %c0_28 = arith.constant 0 : index
    %c0_29 = arith.constant 0 : index
    %35 = vector.load %arg5[%c0_26, %c1_27, %c0_28, %c0_29] : memref<1x4x4x16xf32, #tpu.memory_space<vmem>>, vector<1x1x4x16xf32>
    %36 = vector.shape_cast %35 : vector<1x1x4x16xf32> to vector<4x16xf32>
    %37 = vector.shape_cast %36 : vector<4x16xf32> to vector<1x4x16xf32>
    %38 = vector.broadcast %28 : vector<2x1x16xf32> to vector<2x4x16xf32>
    %39 = vector.broadcast %34 : vector<1x4x16xf32> to vector<2x4x16xf32>
    %40 = arith.mulf %38, %39 : vector<2x4x16xf32>
    %41 = vector.broadcast %31 : vector<2x1x16xf32> to vector<2x4x16xf32>
    %42 = vector.broadcast %37 : vector<1x4x16xf32> to vector<2x4x16xf32>
    %43 = arith.mulf %41, %42 : vector<2x4x16xf32>
    %44 = arith.subf %40, %43 : vector<2x4x16xf32>
    %45 = vector.broadcast %28 : vector<2x1x16xf32> to vector<2x4x16xf32>
    %46 = vector.broadcast %37 : vector<1x4x16xf32> to vector<2x4x16xf32>
    %47 = arith.mulf %45, %46 : vector<2x4x16xf32>
    %48 = vector.broadcast %31 : vector<2x1x16xf32> to vector<2x4x16xf32>
    %49 = vector.broadcast %34 : vector<1x4x16xf32> to vector<2x4x16xf32>
    %50 = arith.mulf %48, %49 : vector<2x4x16xf32>
    %51 = arith.addf %47, %50 : vector<2x4x16xf32>
    %52 = arith.addf %18, %44 : vector<2x4x16xf32>
    %53 = arith.addf %25, %51 : vector<2x4x16xf32>
    %c0_30 = arith.constant 0 : index
    %c0_31 = arith.constant 0 : index
    %c2 = arith.constant 2 : index
    %c0_32 = arith.constant 0 : index
    %54 = vector.load %arg2[%c0_30, %c0_31, %c2, %c0_32] : memref<1x2x4x16xf32, #tpu.memory_space<vmem>>, vector<1x2x1x16xf32>
    %55 = vector.shape_cast %54 : vector<1x2x1x16xf32> to vector<2x16xf32>
    %56 = vector.shape_cast %55 : vector<2x16xf32> to vector<2x1x16xf32>
    %c0_33 = arith.constant 0 : index
    %c0_34 = arith.constant 0 : index
    %c2_35 = arith.constant 2 : index
    %c0_36 = arith.constant 0 : index
    %57 = vector.load %arg3[%c0_33, %c0_34, %c2_35, %c0_36] : memref<1x2x4x16xf32, #tpu.memory_space<vmem>>, vector<1x2x1x16xf32>
    %58 = vector.shape_cast %57 : vector<1x2x1x16xf32> to vector<2x16xf32>
    %59 = vector.shape_cast %58 : vector<2x16xf32> to vector<2x1x16xf32>
    %c0_37 = arith.constant 0 : index
    %c2_38 = arith.constant 2 : index
    %c0_39 = arith.constant 0 : index
    %c0_40 = arith.constant 0 : index
    %60 = vector.load %arg4[%c0_37, %c2_38, %c0_39, %c0_40] : memref<1x4x4x16xf32, #tpu.memory_space<vmem>>, vector<1x1x4x16xf32>
    %61 = vector.shape_cast %60 : vector<1x1x4x16xf32> to vector<4x16xf32>
    %62 = vector.shape_cast %61 : vector<4x16xf32> to vector<1x4x16xf32>
    %c0_41 = arith.constant 0 : index
    %c2_42 = arith.constant 2 : index
    %c0_43 = arith.constant 0 : index
    %c0_44 = arith.constant 0 : index
    %63 = vector.load %arg5[%c0_41, %c2_42, %c0_43, %c0_44] : memref<1x4x4x16xf32, #tpu.memory_space<vmem>>, vector<1x1x4x16xf32>
    %64 = vector.shape_cast %63 : vector<1x1x4x16xf32> to vector<4x16xf32>
    %65 = vector.shape_cast %64 : vector<4x16xf32> to vector<1x4x16xf32>
    %66 = vector.broadcast %56 : vector<2x1x16xf32> to vector<2x4x16xf32>
    %67 = vector.broadcast %62 : vector<1x4x16xf32> to vector<2x4x16xf32>
    %68 = arith.mulf %66, %67 : vector<2x4x16xf32>
    %69 = vector.broadcast %59 : vector<2x1x16xf32> to vector<2x4x16xf32>
    %70 = vector.broadcast %65 : vector<1x4x16xf32> to vector<2x4x16xf32>
    %71 = arith.mulf %69, %70 : vector<2x4x16xf32>
    %72 = arith.subf %68, %71 : vector<2x4x16xf32>
    %73 = vector.broadcast %56 : vector<2x1x16xf32> to vector<2x4x16xf32>
    %74 = vector.broadcast %65 : vector<1x4x16xf32> to vector<2x4x16xf32>
    %75 = arith.mulf %73, %74 : vector<2x4x16xf32>
    %76 = vector.broadcast %59 : vector<2x1x16xf32> to vector<2x4x16xf32>
    %77 = vector.broadcast %62 : vector<1x4x16xf32> to vector<2x4x16xf32>
    %78 = arith.mulf %76, %77 : vector<2x4x16xf32>
    %79 = arith.addf %75, %78 : vector<2x4x16xf32>
    %80 = arith.addf %52, %72 : vector<2x4x16xf32>
    %81 = arith.addf %53, %79 : vector<2x4x16xf32>
    %c0_45 = arith.constant 0 : index
    %c0_46 = arith.constant 0 : index
    %c3 = arith.constant 3 : index
    %c0_47 = arith.constant 0 : index
    %82 = vector.load %arg2[%c0_45, %c0_46, %c3, %c0_47] : memref<1x2x4x16xf32, #tpu.memory_space<vmem>>, vector<1x2x1x16xf32>
    %83 = vector.shape_cast %82 : vector<1x2x1x16xf32> to vector<2x16xf32>
    %84 = vector.shape_cast %83 : vector<2x16xf32> to vector<2x1x16xf32>
    %c0_48 = arith.constant 0 : index
    %c0_49 = arith.constant 0 : index
    %c3_50 = arith.constant 3 : index
    %c0_51 = arith.constant 0 : index
    %85 = vector.load %arg3[%c0_48, %c0_49, %c3_50, %c0_51] : memref<1x2x4x16xf32, #tpu.memory_space<vmem>>, vector<1x2x1x16xf32>
    %86 = vector.shape_cast %85 : vector<1x2x1x16xf32> to vector<2x16xf32>
    %87 = vector.shape_cast %86 : vector<2x16xf32> to vector<2x1x16xf32>
    %c0_52 = arith.constant 0 : index
    %c3_53 = arith.constant 3 : index
    %c0_54 = arith.constant 0 : index
    %c0_55 = arith.constant 0 : index
    %88 = vector.load %arg4[%c0_52, %c3_53, %c0_54, %c0_55] : memref<1x4x4x16xf32, #tpu.memory_space<vmem>>, vector<1x1x4x16xf32>
    %89 = vector.shape_cast %88 : vector<1x1x4x16xf32> to vector<4x16xf32>
    %90 = vector.shape_cast %89 : vector<4x16xf32> to vector<1x4x16xf32>
    %c0_56 = arith.constant 0 : index
    %c3_57 = arith.constant 3 : index
    %c0_58 = arith.constant 0 : index
    %c0_59 = arith.constant 0 : index
    %91 = vector.load %arg5[%c0_56, %c3_57, %c0_58, %c0_59] : memref<1x4x4x16xf32, #tpu.memory_space<vmem>>, vector<1x1x4x16xf32>
    %92 = vector.shape_cast %91 : vector<1x1x4x16xf32> to vector<4x16xf32>
    %93 = vector.shape_cast %92 : vector<4x16xf32> to vector<1x4x16xf32>
    %94 = vector.broadcast %84 : vector<2x1x16xf32> to vector<2x4x16xf32>
    %95 = vector.broadcast %90 : vector<1x4x16xf32> to vector<2x4x16xf32>
    %96 = arith.mulf %94, %95 : vector<2x4x16xf32>
    %97 = vector.broadcast %87 : vector<2x1x16xf32> to vector<2x4x16xf32>
    %98 = vector.broadcast %93 : vector<1x4x16xf32> to vector<2x4x16xf32>
    %99 = arith.mulf %97, %98 : vector<2x4x16xf32>
    %100 = arith.subf %96, %99 : vector<2x4x16xf32>
    %101 = vector.broadcast %84 : vector<2x1x16xf32> to vector<2x4x16xf32>
    %102 = vector.broadcast %93 : vector<1x4x16xf32> to vector<2x4x16xf32>
    %103 = arith.mulf %101, %102 : vector<2x4x16xf32>
    %104 = vector.broadcast %87 : vector<2x1x16xf32> to vector<2x4x16xf32>
    %105 = vector.broadcast %90 : vector<1x4x16xf32> to vector<2x4x16xf32>
    %106 = arith.mulf %104, %105 : vector<2x4x16xf32>
    %107 = arith.addf %103, %106 : vector<2x4x16xf32>
    %108 = arith.addf %80, %100 : vector<2x4x16xf32>
    %109 = arith.addf %81, %107 : vector<2x4x16xf32>
    %c0_60 = arith.constant 0 : index
    %c0_61 = arith.constant 0 : index
    %c0_62 = arith.constant 0 : index
    %c0_63 = arith.constant 0 : index
    %110 = vector.load %arg6[%c0_60, %c0_61, %c0_62, %c0_63] : memref<1x2x4x16xf32, #tpu.memory_space<vmem>>, vector<1x2x4x16xf32>
    %111 = vector.shape_cast %110 : vector<1x2x4x16xf32> to vector<2x4x16xf32>
    %112 = vector.shape_cast %108 : vector<2x4x16xf32> to vector<1x2x4x16xf32>
    tpu.vector_store %arg6[%c0_60, %c0_61, %c0_62, %c0_63], %112 {strides = array<i32>} : memref<1x2x4x16xf32, #tpu.memory_space<vmem>>, vector<1x2x4x16xf32>,
    %c0_64 = arith.constant 0 : index
    %c0_65 = arith.constant 0 : index
    %c0_66 = arith.constant 0 : index
    %c0_67 = arith.constant 0 : index
    %113 = vector.load %arg7[%c0_64, %c0_65, %c0_66, %c0_67] : memref<1x2x4x16xf32, #tpu.memory_space<vmem>>, vector<1x2x4x16xf32>
    %114 = vector.shape_cast %113 : vector<1x2x4x16xf32> to vector<2x4x16xf32>
    %115 = vector.shape_cast %109 : vector<2x4x16xf32> to vector<1x2x4x16xf32>
    tpu.vector_store %arg7[%c0_64, %c0_65, %c0_66, %c0_67], %115 {strides = array<i32>} : memref<1x2x4x16xf32, #tpu.memory_space<vmem>>, vector<1x2x4x16xf32>,
    return
  }
  func.func @transform_0(%arg0: i32, %arg1: i32) -> (i32, i32, i32, i32) {
    %c0_i32 = arith.constant 0 : i32
    %c0_i32_0 = arith.constant 0 : i32
    %c0_i32_1 = arith.constant 0 : i32
    return %arg0, %c0_i32, %c0_i32_0, %arg1 : i32, i32, i32, i32
  }
  func.func @transform_1(%arg0: i32, %arg1: i32) -> (i32, i32, i32, i32) {
    %c0_i32 = arith.constant 0 : i32
    %c0_i32_0 = arith.constant 0 : i32
    %c0_i32_1 = arith.constant 0 : i32
    return %arg0, %c0_i32, %c0_i32_0, %arg1 : i32, i32, i32, i32
  }
  func.func @transform_2(%arg0: i32, %arg1: i32) -> (i32, i32, i32, i32) {
    %c0_i32 = arith.constant 0 : i32
    %c0_i32_0 = arith.constant 0 : i32
    %c0_i32_1 = arith.constant 0 : i32
    return %arg0, %c0_i32, %c0_i32_0, %arg1 : i32, i32, i32, i32
  }
  func.func @transform_3(%arg0: i32, %arg1: i32) -> (i32, i32, i32, i32) {
    %c0_i32 = arith.constant 0 : i32
    %c0_i32_0 = arith.constant 0 : i32
    %c0_i32_1 = arith.constant 0 : i32
    return %arg0, %c0_i32, %c0_i32_0, %arg1 : i32, i32, i32, i32
  }
  func.func @transform_4(%arg0: i32, %arg1: i32) -> (i32, i32, i32, i32) {
    %c0_i32 = arith.constant 0 : i32
    %c0_i32_0 = arith.constant 0 : i32
    %c0_i32_1 = arith.constant 0 : i32
    return %arg0, %c0_i32, %c0_i32_0, %arg1 : i32, i32, i32, i32
  }
  func.func @transform_5(%arg0: i32, %arg1: i32) -> (i32, i32, i32, i32) {
    %c0_i32 = arith.constant 0 : i32
    %c0_i32_0 = arith.constant 0 : i32
    %c0_i32_1 = arith.constant 0 : i32
    return %arg0, %c0_i32, %c0_i32_0, %arg1 : i32, i32, i32, i32
  }
}

</mosaic_0001>

<llo_original>
// kernel: custom-call.1
$region0: #{custom-call.1}
  %s0 = inlined_call_operand.hbm [shape: c64[4,4,4,4], index: 0, kind: input, shape index: {}]
  %s1 = inlined_call_operand.vmem [shape: f32[4,4,4,4], index: 1, kind: output, shape index: {}]
  %s2 = scalar_lea.hbm %s0, 64
  $region1: #{custom-call.1} parent=0
    #allocation0 [shape = 's32[1]{0}', space=sflag, size = 0x4, scoped, tag = 'scoped memory for custom-call.1']
    %3 = vsyncpa [#allocation0], 0
    %s5 = sshll.u32 %s2, 4
    %s6 = int_to_ptr.hbm [resolvable:$true] %s5
    %s7 = sshll.u32 %s1, 4
    %s8 = int_to_ptr.vmem [resolvable:$true] %s7
    %10 = dma.hbm_to_vmem [thread:$0]  %s6, 1024, %s8, [#allocation0]
    %12 = dma.done [#allocation0], 1024
    %13 = vsyncpa [#allocation0], 1

// kernel: custom-call
$region0: #{custom-call}
  %s0 = inlined_call_operand.hbm [shape: c64[4,4,4,4], index: 0, kind: input, shape index: {}]
  %s1 = inlined_call_operand.vmem [shape: f32[4,4,4,4], index: 1, kind: output, shape index: {}]
  $region1: #{custom-call} parent=0
    #allocation0 [shape = 's32[1]{0}', space=sflag, size = 0x4, scoped, tag = 'scoped memory for custom-call']
    %2 = vsyncpa [#allocation0], 0
    %s4 = sshll.u32 %s0, 4
    %s5 = int_to_ptr.hbm [resolvable:$true] %s4
    %s6 = sshll.u32 %s1, 4
    %s7 = int_to_ptr.vmem [resolvable:$true] %s6
    %9 = dma.hbm_to_vmem [thread:$0]  %s5, 1024, %s7, [#allocation0]
    %11 = dma.done [#allocation0], 1024
    %12 = vsyncpa [#allocation0], 1

// kernel: squeeze.0
$region0: #{squeeze.0}
  %s0 = inlined_call_operand.vmem [shape: f32[1,2,4,16], index: 0, kind: input, shape index: {}]
  %s1 = inlined_call_operand.vmem [shape: f32[2,4,4,4], index: 1, kind: output, shape index: {}]
  $region1: #{squeeze.0} parent=0
    #allocation0 [shape = 'u8[32768]{0}', space=vmem, size = 0x8000, scoped, tag = 'scoped mem for output reshape']
    #allocation1 [shape = 'u8[8192]{0}', space=vmem, size = 0x2000, scoped, tag = 'scoped mem for input reshape']
    %s3 = ssub.s32 16, 1
    %s4 = scalar_lea.vmem %s0, 4
    %v5 = vld [vmem:[%s4] sm:%s3]
    %s6 = scalar_lea.vmem [#allocation1], 8
    %7 = vst [vmem:[%s6] sm:%s3] %v5
    %v8 = vld [vmem:[%s0] sm:%s3]
    %9 = vst [vmem:[#allocation1] sm:%s3] %v8
    %v10 = vld [vmem:[#allocation1] sm:$0xf]
    %vm11 = vcmask 31744
    %12 = vst.msk [vmem:[#allocation0] ss:$8 sm:$0xf] %vm11, %v10
    %s13 = scalar_lea.vmem [#allocation1], 8
    %v14 = vld [vmem:[%s13] sm:$0xf]
    %vm15 = vcmask 31744
    %s16 = scalar_lea.vmem [#allocation0], 32
    %17 = vst.msk [vmem:[%s16] ss:$8 sm:$0xf] %vm15, %v14
    %v18 = vld.sshfl [vmem:[#allocation1] sm:$0xff pattern:$0xba983210]
    %19 = vrot.lane.b32.xlu0 %v18, 124
    %v20 = vpop.permute.xlu0 %19
    %vm21 = vcmask 31744
    %s22 = scalar_lea.vmem [#allocation0], 1
    %23 = vst.msk [vmem:[%s22] ss:$8 sm:$0xf] %vm21, %v20
    %s24 = scalar_lea.vmem [#allocation0], 1
    %25 = vst.msk [vmem:[%s24] ss:$8 sm:$0xf0] %vm21, %v20
    %v26 = vld.sshfl [vmem:[#allocation1] sm:$0xff pattern:$0xba983210]
    %27 = vrot.lane.b32.xlu0 %v26, 120
    %v28 = vpop.permute.xlu0 %27
    %vm29 = vcmask 31744
    %s30 = scalar_lea.vmem [#allocation0], 2
    %31 = vst.msk [vmem:[%s30] ss:$8 sm:$0xf] %vm29, %v28
    %s32 = scalar_lea.vmem [#allocation0], 2
    %33 = vst.msk [vmem:[%s32] ss:$8 sm:$0xf0] %vm29, %v28
    %v34 = vld.sshfl [vmem:[#allocation1] sm:$0xff pattern:$0xba983210]
    %35 = vrot.lane.b32.xlu0 %v34, 116
    %v36 = vpop.permute.xlu0 %35
    %vm37 = vcmask 31744
    %s38 = scalar_lea.vmem [#allocation0], 3
    %39 = vst.msk [vmem:[%s38] ss:$8 sm:$0xf] %vm37, %v36
    %s40 = scalar_lea.vmem [#allocation0], 3
    %41 = vst.msk [vmem:[%s40] ss:$8 sm:$0xf0] %vm37, %v36
    %s43 = ssub.s32 16, 1
    %v44 = vld [vmem:[#allocation0] sm:%s43]
    %s46 = ssub.s32 16, 1
    %47 = vst [vmem:[%s1] sm:%s46] %v44
    %s48 = scalar_lea.vmem [#allocation0], 8
    %v49 = vld [vmem:[%s48] sm:%s43]
    %s51 = ssub.s32 16, 1
    %s52 = scalar_lea.vmem %s1, 4
    %53 = vst [vmem:[%s52] sm:%s51] %v49
    %s54 = scalar_lea.vmem [#allocation0], 16
    %v55 = vld [vmem:[%s54] sm:%s43]
    %s57 = ssub.s32 16, 1
    %s58 = scalar_lea.vmem %s1, 8
    %59 = vst [vmem:[%s58] sm:%s57] %v55
    %s60 = scalar_lea.vmem [#allocation0], 24
    %v61 = vld [vmem:[%s60] sm:%s43]
    %s63 = ssub.s32 16, 1
    %s64 = scalar_lea.vmem %s1, 12
    %65 = vst [vmem:[%s64] sm:%s63] %v61
    %s66 = scalar_lea.vmem [#allocation0], 32
    %v67 = vld [vmem:[%s66] sm:%s43]
    %s69 = ssub.s32 16, 1
    %s70 = scalar_lea.vmem %s1, 16
    %71 = vst [vmem:[%s70] sm:%s69] %v67
    %s72 = scalar_lea.vmem [#allocation0], 40
    %v73 = vld [vmem:[%s72] sm:%s43]
    %s75 = ssub.s32 16, 1
    %s76 = scalar_lea.vmem %s1, 20
    %77 = vst [vmem:[%s76] sm:%s75] %v73
    %s78 = scalar_lea.vmem [#allocation0], 48
    %v79 = vld [vmem:[%s78] sm:%s43]
    %s81 = ssub.s32 16, 1
    %s82 = scalar_lea.vmem %s1, 24
    %83 = vst [vmem:[%s82] sm:%s81] %v79
    %s84 = scalar_lea.vmem [#allocation0], 56
    %v85 = vld [vmem:[%s84] sm:%s43]
    %s87 = ssub.s32 16, 1
    %s88 = scalar_lea.vmem %s1, 28
    %89 = vst [vmem:[%s88] sm:%s87] %v85

// kernel: spectral_conv2d_fast.1
$region0: #{spectral_conv2d_fast.1}
  #allocation0 [shape = 'u32[]', space=smem, size = 0x4, offset = 0x4, fixed_abs, tag = 'smem constant byte address 0x4 - core index']
  #allocation1 [shape = 'u32[72,128]{1,0:T(1,128)}', space=vmem, size = 0x9000, scoped, tag = 'internal scratch']
  %s0 = inlined_call_operand.vmem [shape: f32[4,2,4,16], index: 0, kind: input, shape index: {}]
  %s1 = inlined_call_operand.vmem [shape: f32[4,2,4,16], index: 1, kind: input, shape index: {}]
  %s2 = inlined_call_operand.vmem [shape: f32[4,4,4,16], index: 2, kind: input, shape index: {}]
  %s3 = inlined_call_operand.vmem [shape: f32[4,4,4,16], index: 3, kind: input, shape index: {}]
  %s4 = inlined_call_operand.vmem [shape: f32[4,2,4,16], index: 4, kind: output, shape index: {0}]
  %s5 = inlined_call_operand.vmem [shape: f32[4,2,4,16], index: 5, kind: output, shape index: {1}]
  %6 = xla_tuple %s4, %s5
  %s7 = sld [smem:[#allocation0]]
  $region57: #{spectral_conv2d_fast.1} parent=0
    _
  %s9 = ssub.s32 1, %s7
  %s10 = scalar_select 0, %s9, %s7
  loop: start=0, step=1, limit=6
  $region2: #{spectral_conv2d_fast.1} parent=0 // loop_pre_header
    _
  $region3: #{spectral_conv2d_fast.1} parent=0 // loop_header
    %s12 = sphi 0, %s16
    %p13 = scmp.ge.s32.totalorder %s12, 6
    %s19 = sphi 0, %s31
    %s20 = sphi 0, %s27
    %s21 = sphi 0, %s19
    %s22 = sphi 0, %s20
    %s23 = sphi 0, %s21
    %s24 = sphi 0, %s22
    %s36 = sphi 0, %s38
    %s39 = sphi 0, %s36
    %s40 = sphi 0, %s39
    %s56 = sphi 0, %s40
    %s64 = sphi 0, %s66
    %s67 = sphi 0, %s64
    %s68 = sphi 0, %s67
    %s84 = sphi 0, %s68
    %s92 = sphi 0, %s94
    %s95 = sphi 0, %s92
    %s96 = sphi 0, %s95
    %s112 = sphi 0, %s96
    %s120 = sphi 0, %s122
    %s123 = sphi 0, %s120
    %s124 = sphi 0, %s123
    %s140 = sphi 0, %s124
    %s148 = sphi 0, %s150
    %s151 = sphi 0, %s148
    %s152 = sphi 0, %s151
    %s168 = sphi 0, %s152
    %s176 = sphi 0, %s178
    %s179 = sphi 0, %s176
    %s180 = sphi 0, %s179
    %s196 = sphi 0, %s180
  $region4: #{spectral_conv2d_fast.1} parent=0 // loop_header_branch
    %15 = sbr.rel (%p13) target = $region8
  $region5: #{spectral_conv2d_fast.1} parent=0 // loop_body
    %s17 = ssub.s32 %s12, 1
    %s18 = ssub.s32 %s12, 2
    %s25 = sadd.s32 1, %s20
    %p26 = scmp.ge.s32.totalorder %s25, 1
    %s27 = scalar_select %p26, 0, %s25
    %s28 = sadd.s32 1, %s19
    %s29 = scalar_select %p26, %s28, %s19
    %p30 = scmp.ge.s32.totalorder %s29, 4
    %s31 = scalar_select %p30, 0, %s29
    %s32 = ssub.s32 %s19, %s31
    %s33 = ssub.s32 %s20, %s27
    %s34 = sor.u32 %s32, %s33
    %p35 = scmp.eq.s32.totalorder %s34, 0
    %s37 = sadd.s32 %s36, 1
    %s38 = scalar_select %p35, %s36, %s37
    %p41 = pneg %p35
    %p42 = scmp.eq.s32.totalorder %s12, 3
    %p43 = por %p41, %p42
    %p44 = scmp.ne.s32.totalorder %s36, %s39
    %p45 = scmp.eq.s32.totalorder %s12, 0
    %p46 = por %p44, %p45
    %p47 = scmp.ne.s32.totalorder %s36, %s39
    %p48 = scmp.eq.s32.totalorder %s17, 3
    %p49 = por %p47, %p48
    %p50 = scmp.ne.s32.totalorder %s39, %s40
    %p51 = scmp.eq.s32.totalorder %s17, 0
    %p52 = por %p50, %p51
    %p53 = scmp.ne.s32.totalorder %s39, %s40
    %p54 = scmp.eq.s32.totalorder %s18, 3
    %p55 = por %p53, %p54
    %p57 = scmp.ne.s32.totalorder %s40, %s56
    %p58 = scmp.eq.s32.totalorder %s18, 0
    %p59 = por %p57, %p58
    %s60 = ssub.s32 %s19, %s31
    %s61 = ssub.s32 %s20, %s27
    %s62 = sor.u32 %s60, %s61
    %p63 = scmp.eq.s32.totalorder %s62, 0
    %s65 = sadd.s32 %s64, 1
    %s66 = scalar_select %p63, %s64, %s65
    %p69 = pneg %p63
    %p70 = scmp.eq.s32.totalorder %s12, 3
    %p71 = por %p69, %p70
    %p72 = scmp.ne.s32.totalorder %s64, %s67
    %p73 = scmp.eq.s32.totalorder %s12, 0
    %p74 = por %p72, %p73
    %p75 = scmp.ne.s32.totalorder %s64, %s67
    %p76 = scmp.eq.s32.totalorder %s17, 3
    %p77 = por %p75, %p76
    %p78 = scmp.ne.s32.totalorder %s67, %s68
    %p79 = scmp.eq.s32.totalorder %s17, 0
    %p80 = por %p78, %p79
    %p81 = scmp.ne.s32.totalorder %s67, %s68
    %p82 = scmp.eq.s32.totalorder %s18, 3
    %p83 = por %p81, %p82
    %p85 = scmp.ne.s32.totalorder %s68, %s84
    %p86 = scmp.eq.s32.totalorder %s18, 0
    %p87 = por %p85, %p86
    %s88 = ssub.s32 %s19, %s31
    %s89 = ssub.s32 %s20, %s27
    %s90 = sor.u32 %s88, %s89
    %p91 = scmp.eq.s32.totalorder %s90, 0
    %s93 = sadd.s32 %s92, 1
    %s94 = scalar_select %p91, %s92, %s93
    %p97 = pneg %p91
    %p98 = scmp.eq.s32.totalorder %s12, 3
    %p99 = por %p97, %p98
    %p100 = scmp.ne.s32.totalorder %s92, %s95
    %p101 = scmp.eq.s32.totalorder %s12, 0
    %p102 = por %p100, %p101
    %p103 = scmp.ne.s32.totalorder %s92, %s95
    %p104 = scmp.eq.s32.totalorder %s17, 3
    %p105 = por %p103, %p104
    %p106 = scmp.ne.s32.totalorder %s95, %s96
    %p107 = scmp.eq.s32.totalorder %s17, 0
    %p108 = por %p106, %p107
    %p109 = scmp.ne.s32.totalorder %s95, %s96
    %p110 = scmp.eq.s32.totalorder %s18, 3
    %p111 = por %p109, %p110
    %p113 = scmp.ne.s32.totalorder %s96, %s112
    %p114 = scmp.eq.s32.totalorder %s18, 0
    %p115 = por %p113, %p114
    %s116 = ssub.s32 %s19, %s31
    %s117 = ssub.s32 %s20, %s27
    %s118 = sor.u32 %s116, %s117
    %p119 = scmp.eq.s32.totalorder %s118, 0
    %s121 = sadd.s32 %s120, 1
    %s122 = scalar_select %p119, %s120, %s121
    %p125 = pneg %p119
    %p126 = scmp.eq.s32.totalorder %s12, 3
    %p127 = por %p125, %p126
    %p128 = scmp.ne.s32.totalorder %s120, %s123
    %p129 = scmp.eq.s32.totalorder %s12, 0
    %p130 = por %p128, %p129
    %p131 = scmp.ne.s32.totalorder %s120, %s123
    %p132 = scmp.eq.s32.totalorder %s17, 3
    %p133 = por %p131, %p132
    %p134 = scmp.ne.s32.totalorder %s123, %s124
    %p135 = scmp.eq.s32.totalorder %s17, 0
    %p136 = por %p134, %p135
    %p137 = scmp.ne.s32.totalorder %s123, %s124
    %p138 = scmp.eq.s32.totalorder %s18, 3
    %p139 = por %p137, %p138
    %p141 = scmp.ne.s32.totalorder %s124, %s140
    %p142 = scmp.eq.s32.totalorder %s18, 0
    %p143 = por %p141, %p142
    %s144 = ssub.s32 %s19, %s31
    %s145 = ssub.s32 %s20, %s27
    %s146 = sor.u32 %s144, %s145
    %p147 = scmp.eq.s32.totalorder %s146, 0
    %s149 = sadd.s32 %s148, 1
    %s150 = scalar_select %p147, %s148, %s149
    %p153 = pneg %p147
    %p154 = scmp.eq.s32.totalorder %s12, 3
    %p155 = por %p153, %p154
    %p156 = scmp.ne.s32.totalorder %s148, %s151
    %p157 = scmp.eq.s32.totalorder %s12, 0
    %p158 = por %p156, %p157
    %p159 = scmp.ne.s32.totalorder %s148, %s151
    %p160 = scmp.eq.s32.totalorder %s17, 3
    %p161 = por %p159, %p160
    %p162 = scmp.ne.s32.totalorder %s151, %s152
    %p163 = scmp.eq.s32.totalorder %s17, 0
    %p164 = por %p162, %p163
    %p165 = scmp.ne.s32.totalorder %s151, %s152
    %p166 = scmp.eq.s32.totalorder %s18, 3
    %p167 = por %p165, %p166
    %p169 = scmp.ne.s32.totalorder %s152, %s168
    %p170 = scmp.eq.s32.totalorder %s18, 0
    %p171 = por %p169, %p170
    %s172 = ssub.s32 %s19, %s31
    %s173 = ssub.s32 %s20, %s27
    %s174 = sor.u32 %s172, %s173
    %p175 = scmp.eq.s32.totalorder %s174, 0
    %s177 = sadd.s32 %s176, 1
    %s178 = scalar_select %p175, %s176, %s177
    %p181 = pneg %p175
    %p182 = scmp.eq.s32.totalorder %s12, 3
    %p183 = por %p181, %p182
    %p184 = scmp.ne.s32.totalorder %s176, %s179
    %p185 = scmp.eq.s32.totalorder %s12, 0
    %p186 = por %p184, %p185
    %p187 = scmp.ne.s32.totalorder %s176, %s179
    %p188 = scmp.eq.s32.totalorder %s17, 3
    %p189 = por %p187, %p188
    %p190 = scmp.ne.s32.totalorder %s179, %s180
    %p191 = scmp.eq.s32.totalorder %s17, 0
    %p192 = por %p190, %p191
    %p193 = scmp.ne.s32.totalorder %s179, %s180
    %p194 = scmp.eq.s32.totalorder %s18, 3
    %p195 = por %p193, %p194
    %p197 = scmp.ne.s32.totalorder %s180, %s196
    %p198 = scmp.eq.s32.totalorder %s18, 0
    %p199 = por %p197, %p198
    %p200 = scmp.le.s32.totalorder 1, %s12
    %p201 = scmp.lt.s32.totalorder %s12, 5
    %p202 = pnand %p200, %p201
    %p203 = pneg %p202
    // Predicated region
    $region9: #{spectral_conv2d_fast.1} parent=5 // pred_check
      _
    $region10: #{spectral_conv2d_fast.1} parent=5 // pred_check_branch
      %205 = sbr.rel (%p202) target = $region12
    $region11: #{spectral_conv2d_fast.1} parent=5 // pred_region
      %s206 = ssub.s32 %s12, 1
    $region12: #{spectral_conv2d_fast.1} parent=5 // pred_fallthru
      _
    %p207 = scmp.lt.s32.totalorder %s12, 4
    // Predicated region
    $region13: #{spectral_conv2d_fast.1} parent=5 // pred_check
      %p208 = pneg %p207
    $region14: #{spectral_conv2d_fast.1} parent=5 // pred_check_branch
      %210 = sbr.rel (%p208) target = $region16
    $region15: #{spectral_conv2d_fast.1} parent=5 // pred_region
      // Predicated region
      $region17: #{spectral_conv2d_fast.1} parent=15 // pred_check
        %p211 = pneg %p46
      $region18: #{spectral_conv2d_fast.1} parent=15 // pred_check_branch
        %213 = sbr.rel (%p211) target = $region20
      $region19: #{spectral_conv2d_fast.1} parent=15 // pred_region
        %p214 = scmp.lt.s32.totalorder %s19, 3
        %s215 = scalar_select %p214, %s19, 3
        %p216 = scmp.lt.s32.totalorder %s20, 0
        %s217 = scalar_select %p216, %s20, 0
        %s218 = smul.addr %s215, 2
        %s219 = sadd.s32 %s217, %s218
        %s220 = smul.addr %s219, 4
        %s221 = scalar_lea.vmem %s0, %s220
      $region20: #{spectral_conv2d_fast.1} parent=15 // pred_fallthru
        _
      // Predicated region
      $region21: #{spectral_conv2d_fast.1} parent=15 // pred_check
        %p222 = pneg %p74
      $region22: #{spectral_conv2d_fast.1} parent=15 // pred_check_branch
        %224 = sbr.rel (%p222) target = $region24
      $region23: #{spectral_conv2d_fast.1} parent=15 // pred_region
        %p225 = scmp.lt.s32.totalorder %s19, 3
        %s226 = scalar_select %p225, %s19, 3
        %p227 = scmp.lt.s32.totalorder %s20, 0
        %s228 = scalar_select %p227, %s20, 0
        %s229 = smul.addr %s226, 2
        %s230 = sadd.s32 %s228, %s229
        %s231 = smul.addr %s230, 4
        %s232 = scalar_lea.vmem %s1, %s231
      $region24: #{spectral_conv2d_fast.1} parent=15 // pred_fallthru
        _
      // Predicated region
      $region25: #{spectral_conv2d_fast.1} parent=15 // pred_check
        %p233 = pneg %p102
      $region26: #{spectral_conv2d_fast.1} parent=15 // pred_check_branch
        %235 = sbr.rel (%p233) target = $region28
      $region27: #{spectral_conv2d_fast.1} parent=15 // pred_region
        %p236 = scmp.lt.s32.totalorder %s19, 3
        %s237 = scalar_select %p236, %s19, 3
        %p238 = scmp.lt.s32.totalorder %s20, 0
        %s239 = scalar_select %p238, %s20, 0
        %s240 = smul.addr %s237, 4
        %s241 = sadd.s32 %s239, %s240
        %s242 = smul.addr %s241, 4
        %s243 = scalar_lea.vmem %s2, %s242
      $region28: #{spectral_conv2d_fast.1} parent=15 // pred_fallthru
        _
      // Predicated region
      $region29: #{spectral_conv2d_fast.1} parent=15 // pred_check
        %p244 = pneg %p130
      $region30: #{spectral_conv2d_fast.1} parent=15 // pred_check_branch
        %246 = sbr.rel (%p244) target = $region32
      $region31: #{spectral_conv2d_fast.1} parent=15 // pred_region
        %p247 = scmp.lt.s32.totalorder %s19, 3
        %s248 = scalar_select %p247, %s19, 3
        %p249 = scmp.lt.s32.totalorder %s20, 0
        %s250 = scalar_select %p249, %s20, 0
        %s251 = smul.addr %s248, 4
        %s252 = sadd.s32 %s250, %s251
        %s253 = smul.addr %s252, 4
        %s254 = scalar_lea.vmem %s3, %s253
      $region32: #{spectral_conv2d_fast.1} parent=15 // pred_fallthru
        _
    $region16: #{spectral_conv2d_fast.1} parent=5 // pred_fallthru
      _
    %p255 = scmp.le.s32.totalorder 1, %s12
    %p256 = scmp.lt.s32.totalorder %s12, 5
    %p257 = pnand %p255, %p256
    %p258 = pneg %p257
    // Predicated region
    $region33: #{spectral_conv2d_fast.1} parent=5 // pred_check
      _
    $region34: #{spectral_conv2d_fast.1} parent=5 // pred_check_branch
      %260 = sbr.rel (%p257) target = $region36
    $region35: #{spectral_conv2d_fast.1} parent=5 // pred_region
      %s261 = ssub.s32 %s12, 1
      %p262 = scmp.lt.s32.totalorder %s21, 3
      %s263 = scalar_select %p262, %s21, 3
      %p264 = scmp.lt.s32.totalorder %s22, 0
      %s265 = scalar_select %p264, %s22, 0
      %s266 = smul.addr %s263, 2
      %s267 = sadd.s32 %s265, %s266
      %s268 = smul.addr %s267, 4
      %s269 = scalar_lea.vmem %s0, %s268
      %p270 = pneg %p52
      %p271 = pneg %p49
      %p272 = scmp.lt.s32.totalorder %s21, 3
      %s273 = scalar_select %p272, %s21, 3
      %p274 = scmp.lt.s32.totalorder %s22, 0
      %s275 = scalar_select %p274, %s22, 0
      %s276 = smul.addr %s273, 2
      %s277 = sadd.s32 %s275, %s276
      %s278 = smul.addr %s277, 4
      %s279 = scalar_lea.vmem %s1, %s278
      %p280 = pneg %p80
      %p281 = pneg %p77
      %p282 = scmp.lt.s32.totalorder %s21, 3
      %s283 = scalar_select %p282, %s21, 3
      %p284 = scmp.lt.s32.totalorder %s22, 0
      %s285 = scalar_select %p284, %s22, 0
      %s286 = smul.addr %s283, 4
      %s287 = sadd.s32 %s285, %s286
      %s288 = smul.addr %s287, 4
      %s289 = scalar_lea.vmem %s2, %s288
      %p290 = pneg %p108
      %p291 = pneg %p105
      %p292 = scmp.lt.s32.totalorder %s21, 3
      %s293 = scalar_select %p292, %s21, 3
      %p294 = scmp.lt.s32.totalorder %s22, 0
      %s295 = scalar_select %p294, %s22, 0
      %s296 = smul.addr %s293, 4
      %s297 = sadd.s32 %s295, %s296
      %s298 = smul.addr %s297, 4
      %s299 = scalar_lea.vmem %s3, %s298
      %p300 = pneg %p136
      %p301 = pneg %p133
      %p302 = pneg %p164
      %p303 = pneg %p161
      %p304 = scmp.lt.s32.totalorder %s21, 3
      %s305 = scalar_select %p304, %s21, 3
      %p306 = scmp.lt.s32.totalorder %s22, 0
      %s307 = scalar_select %p306, %s22, 0
      %s308 = smul.addr %s305, 2
      %s309 = sadd.s32 %s307, %s308
      %s310 = smul.addr %s309, 4
      %s311 = scalar_lea.vmem %s4, %s310
      %p312 = pneg %p192
      %p313 = pneg %p189
      %p314 = scmp.lt.s32.totalorder %s21, 3
      %s315 = scalar_select %p314, %s21, 3
      %p316 = scmp.lt.s32.totalorder %s22, 0
      %s317 = scalar_select %p316, %s22, 0
      %s318 = smul.addr %s315, 2
      %s319 = sadd.s32 %s317, %s318
      %s320 = smul.addr %s319, 4
      %s321 = scalar_lea.vmem %s5, %s320
      %p322 = scmp.lt.s32.totalorder %s21, 3
      %s323 = scalar_select %p322, %s21, 3
      %p324 = scmp.lt.s32.totalorder %s22, 0
      %s325 = scalar_select %p324, %s22, 0
      %s326 = smul.addr %s323, 2
      %s327 = sadd.s32 %s325, %s326
      %s328 = smul.addr %s327, 4
      %s329 = scalar_lea.vmem %s0, %s328
      %p330 = scmp.lt.s32.totalorder %s21, 3
      %s331 = scalar_select %p330, %s21, 3
      %p332 = scmp.lt.s32.totalorder %s22, 0
      %s333 = scalar_select %p332, %s22, 0
      %s334 = smul.addr %s331, 2
      %s335 = sadd.s32 %s333, %s334
      %s336 = smul.addr %s335, 4
      %s337 = scalar_lea.vmem %s1, %s336
      %p338 = scmp.lt.s32.totalorder %s21, 3
      %s339 = scalar_select %p338, %s21, 3
      %p340 = scmp.lt.s32.totalorder %s22, 0
      %s341 = scalar_select %p340, %s22, 0
      %s342 = smul.addr %s339, 4
      %s343 = sadd.s32 %s341, %s342
      %s344 = smul.addr %s343, 4
      %s345 = scalar_lea.vmem %s2, %s344
      %p346 = scmp.lt.s32.totalorder %s21, 3
      %s347 = scalar_select %p346, %s21, 3
      %p348 = scmp.lt.s32.totalorder %s22, 0
      %s349 = scalar_select %p348, %s22, 0
      %s350 = smul.addr %s347, 4
      %s351 = sadd.s32 %s349, %s350
      %s352 = smul.addr %s351, 4
      %s353 = scalar_lea.vmem %s3, %s352
      %p354 = scmp.lt.s32.totalorder %s21, 3
      %s355 = scalar_select %p354, %s21, 3
      %p356 = scmp.lt.s32.totalorder %s22, 0
      %s357 = scalar_select %p356, %s22, 0
      %s358 = smul.addr %s355, 2
      %s359 = sadd.s32 %s357, %s358
      %s360 = smul.addr %s359, 4
      %s361 = scalar_lea.vmem %s4, %s360
      %p362 = scmp.lt.s32.totalorder %s21, 3
      %s363 = scalar_select %p362, %s21, 3
      %p364 = scmp.lt.s32.totalorder %s22, 0
      %s365 = scalar_select %p364, %s22, 0
      %s366 = smul.addr %s363, 2
      %s367 = sadd.s32 %s365, %s366
      %s368 = smul.addr %s367, 4
      %s369 = scalar_lea.vmem %s5, %s368
      %v370 = vld [vmem:[%s329] sm:$0x1]
      %v371 = vld [vmem:[%s329 + $0x4] sm:$0x1]
      %v372 = vld [vmem:[%s337] sm:$0x1]
      %v373 = vld [vmem:[%s337 + $0x4] sm:$0x1]
      %v374 = vld [vmem:[%s345] sm:$0xf]
      %v375 = vld [vmem:[%s353] sm:$0xf]
      %v376 = vperm.slane %v370, 0
      %v377 = vperm.slane %v371, 0
      %v378 = vmul.f32 %v376, %v374
      %v379 = vmul.f32 %v377, %v374
      %v380 = vperm.slane %v372, 0
      %v381 = vperm.slane %v373, 0
      %v382 = vmul.f32 %v380, %v375
      %v383 = vmul.f32 %v381, %v375
      %v384 = vsub.f32 %v378, %v382
      %v385 = vsub.f32 %v379, %v383
      %v386 = vmul.f32 %v376, %v375
      %v387 = vmul.f32 %v377, %v375
      %v388 = vmul.f32 %v380, %v374
      %v389 = vmul.f32 %v381, %v374
      %v390 = vadd.f32 %v386, %v388
      %v391 = vadd.f32 %v387, %v389
      %v392 = vld [vmem:[%s329 + $0x1] sm:$0x1]
      %v393 = vld [vmem:[%s329 + $0x5] sm:$0x1]
      %v394 = vld [vmem:[%s337 + $0x1] sm:$0x1]
      %v395 = vld [vmem:[%s337 + $0x5] sm:$0x1]
      %s396 = scalar_lea.vmem %s345, 4
      %v397 = vld [vmem:[%s396] sm:$0xf]
      %s398 = scalar_lea.vmem %s353, 4
      %v399 = vld [vmem:[%s398] sm:$0xf]
      %v400 = vperm.slane %v392, 0
      %v401 = vperm.slane %v393, 0
      %v402 = vmul.f32 %v400, %v397
      %v403 = vmul.f32 %v401, %v397
      %v404 = vperm.slane %v394, 0
      %v405 = vperm.slane %v395, 0
      %v406 = vmul.f32 %v404, %v399
      %v407 = vmul.f32 %v405, %v399
      %v408 = vsub.f32 %v402, %v406
      %v409 = vsub.f32 %v403, %v407
      %v410 = vmul.f32 %v400, %v399
      %v411 = vmul.f32 %v401, %v399
      %v412 = vmul.f32 %v404, %v397
      %v413 = vmul.f32 %v405, %v397
      %v414 = vadd.f32 %v410, %v412
      %v415 = vadd.f32 %v411, %v413
      %v416 = vadd.f32 %v384, %v408
      %v417 = vadd.f32 %v385, %v409
      %v418 = vadd.f32 %v390, %v414
      %v419 = vadd.f32 %v391, %v415
      %v420 = vld [vmem:[%s329 + $0x2] sm:$0x1]
      %v421 = vld [vmem:[%s329 + $0x6] sm:$0x1]
      %v422 = vld [vmem:[%s337 + $0x2] sm:$0x1]
      %v423 = vld [vmem:[%s337 + $0x6] sm:$0x1]
      %s424 = scalar_lea.vmem %s345, 8
      %v425 = vld [vmem:[%s424] sm:$0xf]
      %s426 = scalar_lea.vmem %s353, 8
      %v427 = vld [vmem:[%s426] sm:$0xf]
      %v428 = vperm.slane %v420, 0
      %v429 = vperm.slane %v421, 0
      %v430 = vmul.f32 %v428, %v425
      %v431 = vmul.f32 %v429, %v425
      %v432 = vperm.slane %v422, 0
      %v433 = vperm.slane %v423, 0
      %v434 = vmul.f32 %v432, %v427
      %v435 = vmul.f32 %v433, %v427
      %v436 = vsub.f32 %v430, %v434
      %v437 = vsub.f32 %v431, %v435
      %v438 = vmul.f32 %v428, %v427
      %v439 = vmul.f32 %v429, %v427
      %v440 = vmul.f32 %v432, %v425
      %v441 = vmul.f32 %v433, %v425
      %v442 = vadd.f32 %v438, %v440
      %v443 = vadd.f32 %v439, %v441
      %v444 = vadd.f32 %v416, %v436
      %v445 = vadd.f32 %v417, %v437
      %v446 = vadd.f32 %v418, %v442
      %v447 = vadd.f32 %v419, %v443
      %v448 = vld [vmem:[%s329 + $0x3] sm:$0x1]
      %v449 = vld [vmem:[%s329 + $0x7] sm:$0x1]
      %v450 = vld [vmem:[%s337 + $0x3] sm:$0x1]
      %v451 = vld [vmem:[%s337 + $0x7] sm:$0x1]
      %s452 = scalar_lea.vmem %s345, 12
      %v453 = vld [vmem:[%s452] sm:$0xf]
      %s454 = scalar_lea.vmem %s353, 12
      %v455 = vld [vmem:[%s454] sm:$0xf]
      %v456 = vperm.slane %v448, 0
      %v457 = vperm.slane %v449, 0
      %v458 = vmul.f32 %v456, %v453
      %v459 = vmul.f32 %v457, %v453
      %v460 = vperm.slane %v450, 0
      %v461 = vperm.slane %v451, 0
      %v462 = vmul.f32 %v460, %v455
      %v463 = vmul.f32 %v461, %v455
      %v464 = vsub.f32 %v458, %v462
      %v465 = vsub.f32 %v459, %v463
      %v466 = vmul.f32 %v456, %v455
      %v467 = vmul.f32 %v457, %v455
      %v468 = vmul.f32 %v460, %v453
      %v469 = vmul.f32 %v461, %v453
      %v470 = vadd.f32 %v466, %v468
      %v471 = vadd.f32 %v467, %v469
      %v472 = vadd.f32 %v444, %v464
      %v473 = vadd.f32 %v445, %v465
      %v474 = vadd.f32 %v446, %v470
      %v475 = vadd.f32 %v447, %v471
      %vm476 = vcmask 125952
      %477 = vst.msk [vmem:[%s361] sm:$0xf] %vm476, %v472
      %478 = vst.msk [vmem:[%s361 + $0x4] sm:$0xf] %vm476, %v473
      %479 = vst.msk [vmem:[%s369] sm:$0xf] %vm476, %v474
      %480 = vst.msk [vmem:[%s369 + $0x4] sm:$0xf] %vm476, %v475
      %p481 = scmp.lt.s32.totalorder %s21, 3
      %s482 = scalar_select %p481, %s21, 3
      %p483 = scmp.lt.s32.totalorder %s22, 0
      %s484 = scalar_select %p483, %s22, 0
      %s485 = smul.addr %s482, 2
      %s486 = sadd.s32 %s484, %s485
      %s487 = smul.addr %s486, 4
      %s488 = scalar_lea.vmem %s4, %s487
      %p489 = scmp.lt.s32.totalorder %s21, 3
      %s490 = scalar_select %p489, %s21, 3
      %p491 = scmp.lt.s32.totalorder %s22, 0
      %s492 = scalar_select %p491, %s22, 0
      %s493 = smul.addr %s490, 2
      %s494 = sadd.s32 %s492, %s493
      %s495 = smul.addr %s494, 4
      %s496 = scalar_lea.vmem %s5, %s495
      // Predicated region
      $region37: #{spectral_conv2d_fast.1} parent=35 // pred_check
        %p497 = pneg %p161
      $region38: #{spectral_conv2d_fast.1} parent=35 // pred_check_branch
        %499 = sbr.rel (%p497) target = $region40
      $region39: #{spectral_conv2d_fast.1} parent=35 // pred_region
        _
      $region40: #{spectral_conv2d_fast.1} parent=35 // pred_fallthru
        _
      // Predicated region
      $region41: #{spectral_conv2d_fast.1} parent=35 // pred_check
        %p500 = pneg %p189
      $region42: #{spectral_conv2d_fast.1} parent=35 // pred_check_branch
        %502 = sbr.rel (%p500) target = $region44
      $region43: #{spectral_conv2d_fast.1} parent=35 // pred_region
        _
      $region44: #{spectral_conv2d_fast.1} parent=35 // pred_fallthru
        _
    $region36: #{spectral_conv2d_fast.1} parent=5 // pred_fallthru
      _
    %p503 = scmp.le.s32.totalorder 2, %s12
    // Predicated region
    $region45: #{spectral_conv2d_fast.1} parent=5 // pred_check
      %p504 = pneg %p503
    $region46: #{spectral_conv2d_fast.1} parent=5 // pred_check_branch
      %506 = sbr.rel (%p504) target = $region48
    $region47: #{spectral_conv2d_fast.1} parent=5 // pred_region
      %s507 = ssub.s32 %s12, 2
      // Predicated region
      $region49: #{spectral_conv2d_fast.1} parent=47 // pred_check
        %p508 = pneg %p167
      $region50: #{spectral_conv2d_fast.1} parent=47 // pred_check_branch
        %510 = sbr.rel (%p508) target = $region52
      $region51: #{spectral_conv2d_fast.1} parent=47 // pred_region
        %p511 = scmp.lt.s32.totalorder %s23, 3
        %s512 = scalar_select %p511, %s23, 3
        %p513 = scmp.lt.s32.totalorder %s24, 0
        %s514 = scalar_select %p513, %s24, 0
        %s515 = smul.addr %s512, 2
        %s516 = sadd.s32 %s514, %s515
        %s517 = smul.addr %s516, 4
        %s518 = scalar_lea.vmem %s4, %s517
      $region52: #{spectral_conv2d_fast.1} parent=47 // pred_fallthru
        _
      // Predicated region
      $region53: #{spectral_conv2d_fast.1} parent=47 // pred_check
        %p519 = pneg %p195
      $region54: #{spectral_conv2d_fast.1} parent=47 // pred_check_branch
        %521 = sbr.rel (%p519) target = $region56
      $region55: #{spectral_conv2d_fast.1} parent=47 // pred_region
        %p522 = scmp.lt.s32.totalorder %s23, 3
        %s523 = scalar_select %p522, %s23, 3
        %p524 = scmp.lt.s32.totalorder %s24, 0
        %s525 = scalar_select %p524, %s24, 0
        %s526 = smul.addr %s523, 2
        %s527 = sadd.s32 %s525, %s526
        %s528 = smul.addr %s527, 4
        %s529 = scalar_lea.vmem %s5, %s528
      $region56: #{spectral_conv2d_fast.1} parent=47 // pred_fallthru
        _
    $region48: #{spectral_conv2d_fast.1} parent=5 // pred_fallthru
      _
  $region6: #{spectral_conv2d_fast.1} parent=0 // loop_footer
    %s16 = sadd.s32 1, %s12
  $region7: #{spectral_conv2d_fast.1} parent=0 // loop_footer_branch
    %11 = sbr.rel target = $region3
  $region8: #{spectral_conv2d_fast.1} parent=0 // loop_exit
    _

// kernel: reverse.6
$region0: #{reverse.6}
  %s0 = inlined_call_operand.vmem [shape: f32[2,4,16,7], index: 0, kind: input, shape index: {}]
  %s1 = inlined_call_operand.vmem [shape: f32[2,4,16,7], index: 1, kind: output, shape index: {}]
  $region1: #{reverse.6} parent=0
    #allocation0 [shape = 'u8[65536]{0}', space=vmem, size = 0x10000, scoped, tag = 'operand span for operand 0']
    #allocation1 [shape = 'u8[32768]{0}', space=vmem, size = 0x8000, scoped, tag = 'operand span for operand 1']
    %s2 = scalar_lea.vmem [#allocation0], 8
    // Predicated region
    $region2: #{reverse.6} parent=1 // pred_check
      _
    $region3: #{reverse.6} parent=1 // pred_check_branch
      %4 = sbr.rel (0) target = $region5
    $region4: #{reverse.6} parent=1 // pred_region
      // Predicated region
      $region6: #{reverse.6} parent=4 // pred_check
        _
      $region7: #{reverse.6} parent=4 // pred_check_branch
        %6 = sbr.rel (0) target = $region9
      $region8: #{reverse.6} parent=4 // pred_region
        // Predicated region
        $region21: #{reverse.6} parent=8 // pred_check
          _
        $region22: #{reverse.6} parent=8 // pred_check_branch
          %36 = sbr.rel (0) target = $region24
        $region23: #{reverse.6} parent=8 // pred_region
          loop: start=0, step=1, limit=1
          $region25: #{reverse.6} parent=23 // loop_pre_header
            _
          $region26: #{reverse.6} parent=23 // loop_header
            %s38 = sphi 0, %s42
            %p39 = scmp.ge.s32.totalorder %s38, 1
            %s43 = sphi %s0, %s0
            %s44 = sphi %s2, %s2
          $region27: #{reverse.6} parent=23 // loop_header_branch
            %41 = sbr.rel (%p39) target = $region31
          $region28: #{reverse.6} parent=23 // loop_body
            %v45 = vld [vmem:[%s43] sm:$0xff]
            %46 = vst [vmem:[%s44] sm:$0xff] %v45
            %v47 = vld [vmem:[%s43 + $0x8] sm:$0xff]
            %48 = vst [vmem:[%s44 + $0x10] sm:$0xff] %v47
            %v49 = vld [vmem:[%s43 + $0x10] sm:$0xff]
            %50 = vst [vmem:[%s44 + $0x20] sm:$0xff] %v49
            %v51 = vld [vmem:[%s43 + $0x18] sm:$0xff]
            %52 = vst [vmem:[%s44 + $0x30] sm:$0xff] %v51
            %v53 = vld [vmem:[%s43 + $0x20] sm:$0xff]
            %54 = vst [vmem:[%s44 + $0x40] sm:$0xff] %v53
            %v55 = vld [vmem:[%s43 + $0x28] sm:$0xff]
            %56 = vst [vmem:[%s44 + $0x50] sm:$0xff] %v55
            %v57 = vld [vmem:[%s43 + $0x30] sm:$0xff]
            %58 = vst [vmem:[%s44 + $0x60] sm:$0xff] %v57
            %v59 = vld [vmem:[%s43 + $0x38] sm:$0xff]
            %60 = vst [vmem:[%s44 + $0x70] sm:$0xff] %v59
          $region29: #{reverse.6} parent=23 // loop_footer
            %s42 = sadd.s32 1, %s38
          $region30: #{reverse.6} parent=23 // loop_footer_branch
            %37 = sbr.rel target = $region26
          $region31: #{reverse.6} parent=23 // loop_exit
            _
        $region24: #{reverse.6} parent=8 // pred_fallthru
          _
        // Predicated region
        $region32: #{reverse.6} parent=8 // pred_check
          _
        $region33: #{reverse.6} parent=8 // pred_check_branch
          %62 = sbr.rel target = $region35
        $region34: #{reverse.6} parent=8 // pred_region
          _
        $region35: #{reverse.6} parent=8 // pred_fallthru
          _
      $region9: #{reverse.6} parent=4 // pred_fallthru
        _
      // Predicated region
      $region10: #{reverse.6} parent=4 // pred_check
        _
      $region11: #{reverse.6} parent=4 // pred_check_branch
        %8 = sbr.rel target = $region13
      $region12: #{reverse.6} parent=4 // pred_region
        %s10 = ssub.s32 256, 1
        loop: start=0, step=1, limit=1
        $region14: #{reverse.6} parent=12 // loop_pre_header
          _
        $region15: #{reverse.6} parent=12 // loop_header
          %s12 = sphi 0, %s16
          %p13 = scmp.ge.s32.totalorder %s12, 1
          %s17 = sphi %s0, %s0
          %s18 = sphi %s2, %s2
        $region16: #{reverse.6} parent=12 // loop_header_branch
          %15 = sbr.rel (%p13) target = $region20
        $region17: #{reverse.6} parent=12 // loop_body
          %v19 = vld [vmem:[%s17] sm:%s10]
          %20 = vst [vmem:[%s18] sm:%s10] %v19
          %v21 = vld [vmem:[%s17 + $0x8] sm:%s10]
          %22 = vst [vmem:[%s18 + $0x10] sm:%s10] %v21
          %v23 = vld [vmem:[%s17 + $0x10] sm:%s10]
          %24 = vst [vmem:[%s18 + $0x20] sm:%s10] %v23
          %v25 = vld [vmem:[%s17 + $0x18] sm:%s10]
          %26 = vst [vmem:[%s18 + $0x30] sm:%s10] %v25
          %v27 = vld [vmem:[%s17 + $0x20] sm:%s10]
          %28 = vst [vmem:[%s18 + $0x40] sm:%s10] %v27
          %v29 = vld [vmem:[%s17 + $0x28] sm:%s10]
          %30 = vst [vmem:[%s18 + $0x50] sm:%s10] %v29
          %v31 = vld [vmem:[%s17 + $0x30] sm:%s10]
          %32 = vst [vmem:[%s18 + $0x60] sm:%s10] %v31
          %v33 = vld [vmem:[%s17 + $0x38] sm:%s10]
          %34 = vst [vmem:[%s18 + $0x70] sm:%s10] %v33
        $region18: #{reverse.6} parent=12 // loop_footer
          %s16 = sadd.s32 1, %s12
        $region19: #{reverse.6} parent=12 // loop_footer_branch
          %11 = sbr.rel target = $region15
        $region20: #{reverse.6} parent=12 // loop_exit
          _
      $region13: #{reverse.6} parent=4 // pred_fallthru
        _
    $region5: #{reverse.6} parent=1 // pred_fallthru
      _
    %63 = vnop
    %s64 = scalar_lea.vmem [#allocation0], 7
    %v65 = vld [vmem:[%s64] ss:$-1 sm:$0xff]
    %v66 = vrot.slane %v65, 1
    %67 = vst [vmem:[#allocation1] sm:$0xff] %v66
    %s68 = scalar_lea.vmem [#allocation0], 8
    %s69 = scalar_lea.vmem %s68, 7 [#allocation0]
    %v70 = vld [vmem:[%s69] ss:$-1 sm:$0xff]
    %v71 = vrot.slane %v70, 1
    %v72 = vlaneseq
    %v73 = vshrl.u32 %v72, 7
    %vm74 = vcmp.lt.s32.totalorder %v73, 7
    %75 = vst.msk [vmem:[#allocation1] sm:$0xff] %vm74, %v71
    %s76 = scalar_lea.vmem [#allocation1], 8
    %s77 = scalar_lea.vmem [#allocation0], 16
    %s78 = scalar_lea.vmem %s77, 7 [#allocation0]
    %v79 = vld [vmem:[%s78] ss:$-1 sm:$0xff]
    %v80 = vrot.slane %v79, 1
    %81 = vst [vmem:[%s76] sm:$0xff] %v80
    %s82 = scalar_lea.vmem %s77, 8 [#allocation0]
    %s83 = scalar_lea.vmem %s82, 7 [#allocation0]
    %v84 = vld [vmem:[%s83] ss:$-1 sm:$0xff]
    %v85 = vrot.slane %v84, 1
    %v86 = vlaneseq
    %v87 = vshrl.u32 %v86, 7
    %vm88 = vcmp.lt.s32.totalorder %v87, 7
    %89 = vst.msk [vmem:[%s76] sm:$0xff] %vm88, %v85
    %s90 = scalar_lea.vmem [#allocation1], 16
    %s91 = scalar_lea.vmem [#allocation0], 32
    %s92 = scalar_lea.vmem %s91, 7 [#allocation0]
    %v93 = vld [vmem:[%s92] ss:$-1 sm:$0xff]
    %v94 = vrot.slane %v93, 1
    %95 = vst [vmem:[%s90] sm:$0xff] %v94
    %s96 = scalar_lea.vmem %s91, 8 [#allocation0]
    %s97 = scalar_lea.vmem %s96, 7 [#allocation0]
    %v98 = vld [vmem:[%s97] ss:$-1 sm:$0xff]
    %v99 = vrot.slane %v98, 1
    %v100 = vlaneseq
    %v101 = vshrl.u32 %v100, 7
    %vm102 = vcmp.lt.s32.totalorder %v101, 7
    %103 = vst.msk [vmem:[%s90] sm:$0xff] %vm102, %v99
    %s104 = scalar_lea.vmem [#allocation1], 24
    %s105 = scalar_lea.vmem [#allocation0], 48
    %s106 = scalar_lea.vmem %s105, 7 [#allocation0]
    %v107 = vld [vmem:[%s106] ss:$-1 sm:$0xff]
    %v108 = vrot.slane %v107, 1
    %109 = vst [vmem:[%s104] sm:$0xff] %v108
    %s110 = scalar_lea.vmem %s105, 8 [#allocation0]
    %s111 = scalar_lea.vmem %s110, 7 [#allocation0]
    %v112 = vld [vmem:[%s111] ss:$-1 sm:$0xff]
    %v113 = vrot.slane %v112, 1
    %v114 = vlaneseq
    %v115 = vshrl.u32 %v114, 7
    %vm116 = vcmp.lt.s32.totalorder %v115, 7
    %117 = vst.msk [vmem:[%s104] sm:$0xff] %vm116, %v113
    %s118 = scalar_lea.vmem [#allocation1], 32
    %s119 = scalar_lea.vmem [#allocation0], 64
    %s120 = scalar_lea.vmem %s119, 7 [#allocation0]
    %v121 = vld [vmem:[%s120] ss:$-1 sm:$0xff]
    %v122 = vrot.slane %v121, 1
    %123 = vst [vmem:[%s118] sm:$0xff] %v122
    %s124 = scalar_lea.vmem %s119, 8 [#allocation0]
    %s125 = scalar_lea.vmem %s124, 7 [#allocation0]
    %v126 = vld [vmem:[%s125] ss:$-1 sm:$0xff]
    %v127 = vrot.slane %v126, 1
    %v128 = vlaneseq
    %v129 = vshrl.u32 %v128, 7
    %vm130 = vcmp.lt.s32.totalorder %v129, 7
    %131 = vst.msk [vmem:[%s118] sm:$0xff] %vm130, %v127
    %s132 = scalar_lea.vmem [#allocation1], 40
    %s133 = scalar_lea.vmem [#allocation0], 80
    %s134 = scalar_lea.vmem %s133, 7 [#allocation0]
    %v135 = vld [vmem:[%s134] ss:$-1 sm:$0xff]
    %v136 = vrot.slane %v135, 1
    %137 = vst [vmem:[%s132] sm:$0xff] %v136
    %s138 = scalar_lea.vmem %s133, 8 [#allocation0]
    %s139 = scalar_lea.vmem %s138, 7 [#allocation0]
    %v140 = vld [vmem:[%s139] ss:$-1 sm:$0xff]
    %v141 = vrot.slane %v140, 1
    %v142 = vlaneseq
    %v143 = vshrl.u32 %v142, 7
    %vm144 = vcmp.lt.s32.totalorder %v143, 7
    %145 = vst.msk [vmem:[%s132] sm:$0xff] %vm144, %v141
    %s146 = scalar_lea.vmem [#allocation1], 48
    %s147 = scalar_lea.vmem [#allocation0], 96
    %s148 = scalar_lea.vmem %s147, 7 [#allocation0]
    %v149 = vld [vmem:[%s148] ss:$-1 sm:$0xff]
    %v150 = vrot.slane %v149, 1
    %151 = vst [vmem:[%s146] sm:$0xff] %v150
    %s152 = scalar_lea.vmem %s147, 8 [#allocation0]
    %s153 = scalar_lea.vmem %s152, 7 [#allocation0]
    %v154 = vld [vmem:[%s153] ss:$-1 sm:$0xff]
    %v155 = vrot.slane %v154, 1
    %v156 = vlaneseq
    %v157 = vshrl.u32 %v156, 7
    %vm158 = vcmp.lt.s32.totalorder %v157, 7
    %159 = vst.msk [vmem:[%s146] sm:$0xff] %vm158, %v155
    %s160 = scalar_lea.vmem [#allocation1], 56
    %s161 = scalar_lea.vmem [#allocation0], 112
    %s162 = scalar_lea.vmem %s161, 7 [#allocation0]
    %v163 = vld [vmem:[%s162] ss:$-1 sm:$0xff]
    %v164 = vrot.slane %v163, 1
    %165 = vst [vmem:[%s160] sm:$0xff] %v164
    %s166 = scalar_lea.vmem %s161, 8 [#allocation0]
    %s167 = scalar_lea.vmem %s166, 7 [#allocation0]
    %v168 = vld [vmem:[%s167] ss:$-1 sm:$0xff]
    %v169 = vrot.slane %v168, 1
    %v170 = vlaneseq
    %v171 = vshrl.u32 %v170, 7
    %vm172 = vcmp.lt.s32.totalorder %v171, 7
    %173 = vst.msk [vmem:[%s160] sm:$0xff] %vm172, %v169
    // Predicated region
    $region36: #{reverse.6} parent=1 // pred_check
      _
    $region37: #{reverse.6} parent=1 // pred_check_branch
      %175 = sbr.rel (0) target = $region39
    $region38: #{reverse.6} parent=1 // pred_region
      // Predicated region
      $region40: #{reverse.6} parent=38 // pred_check
        _
      $region41: #{reverse.6} parent=38 // pred_check_branch
        %177 = sbr.rel (0) target = $region43
      $region42: #{reverse.6} parent=38 // pred_region
        // Predicated region
        $region55: #{reverse.6} parent=42 // pred_check
          _
        $region56: #{reverse.6} parent=42 // pred_check_branch
          %207 = sbr.rel (0) target = $region58
        $region57: #{reverse.6} parent=42 // pred_region
          loop: start=0, step=1, limit=1
          $region59: #{reverse.6} parent=57 // loop_pre_header
            _
          $region60: #{reverse.6} parent=57 // loop_header
            %s209 = sphi 0, %s213
            %p210 = scmp.ge.s32.totalorder %s209, 1
            %s214 = sphi [#allocation1], [#allocation1]
            %s215 = sphi %s1, %s1
          $region61: #{reverse.6} parent=57 // loop_header_branch
            %212 = sbr.rel (%p210) target = $region65
          $region62: #{reverse.6} parent=57 // loop_body
            %v216 = vld [vmem:[%s214] sm:$0xff]
            %217 = vst [vmem:[%s215] sm:$0xff] %v216
            %v218 = vld [vmem:[%s214 + $0x8] sm:$0xff]
            %219 = vst [vmem:[%s215 + $0x8] sm:$0xff] %v218
            %v220 = vld [vmem:[%s214 + $0x10] sm:$0xff]
            %221 = vst [vmem:[%s215 + $0x10] sm:$0xff] %v220
            %v222 = vld [vmem:[%s214 + $0x18] sm:$0xff]
            %223 = vst [vmem:[%s215 + $0x18] sm:$0xff] %v222
            %v224 = vld [vmem:[%s214 + $0x20] sm:$0xff]
            %225 = vst [vmem:[%s215 + $0x20] sm:$0xff] %v224
            %v226 = vld [vmem:[%s214 + $0x28] sm:$0xff]
            %227 = vst [vmem:[%s215 + $0x28] sm:$0xff] %v226
            %v228 = vld [vmem:[%s214 + $0x30] sm:$0xff]
            %229 = vst [vmem:[%s215 + $0x30] sm:$0xff] %v228
            %v230 = vld [vmem:[%s214 + $0x38] sm:$0xff]
            %231 = vst [vmem:[%s215 + $0x38] sm:$0xff] %v230
          $region63: #{reverse.6} parent=57 // loop_footer
            %s213 = sadd.s32 1, %s209
          $region64: #{reverse.6} parent=57 // loop_footer_branch
            %208 = sbr.rel target = $region60
          $region65: #{reverse.6} parent=57 // loop_exit
            _
        $region58: #{reverse.6} parent=42 // pred_fallthru
          _
        // Predicated region
        $region66: #{reverse.6} parent=42 // pred_check
          _
        $region67: #{reverse.6} parent=42 // pred_check_branch
          %233 = sbr.rel target = $region69
        $region68: #{reverse.6} parent=42 // pred_region
          _
        $region69: #{reverse.6} parent=42 // pred_fallthru
          _
      $region43: #{reverse.6} parent=38 // pred_fallthru
        _
      // Predicated region
      $region44: #{reverse.6} parent=38 // pred_check
        _
      $region45: #{reverse.6} parent=38 // pred_check_branch
        %179 = sbr.rel target = $region47
      $region46: #{reverse.6} parent=38 // pred_region
        %s181 = ssub.s32 256, 1
        loop: start=0, step=1, limit=1
        $region48: #{reverse.6} parent=46 // loop_pre_header
          _
        $region49: #{reverse.6} parent=46 // loop_header
          %s183 = sphi 0, %s187
          %p184 = scmp.ge.s32.totalorder %s183, 1
          %s188 = sphi [#allocation1], [#allocation1]
          %s189 = sphi %s1, %s1
        $region50: #{reverse.6} parent=46 // loop_header_branch
          %186 = sbr.rel (%p184) target = $region54
        $region51: #{reverse.6} parent=46 // loop_body
          %v190 = vld [vmem:[%s188] sm:%s181]
          %191 = vst [vmem:[%s189] sm:%s181] %v190
          %v192 = vld [vmem:[%s188 + $0x8] sm:%s181]
          %193 = vst [vmem:[%s189 + $0x8] sm:%s181] %v192
          %v194 = vld [vmem:[%s188 + $0x10] sm:%s181]
          %195 = vst [vmem:[%s189 + $0x10] sm:%s181] %v194
          %v196 = vld [vmem:[%s188 + $0x18] sm:%s181]
          %197 = vst [vmem:[%s189 + $0x18] sm:%s181] %v196
          %v198 = vld [vmem:[%s188 + $0x20] sm:%s181]
          %199 = vst [vmem:[%s189 + $0x20] sm:%s181] %v198
          %v200 = vld [vmem:[%s188 + $0x28] sm:%s181]
          %201 = vst [vmem:[%s189 + $0x28] sm:%s181] %v200
          %v202 = vld [vmem:[%s188 + $0x30] sm:%s181]
          %203 = vst [vmem:[%s189 + $0x30] sm:%s181] %v202
          %v204 = vld [vmem:[%s188 + $0x38] sm:%s181]
          %205 = vst [vmem:[%s189 + $0x38] sm:%s181] %v204
        $region52: #{reverse.6} parent=46 // loop_footer
          %s187 = sadd.s32 1, %s183
        $region53: #{reverse.6} parent=46 // loop_footer_branch
          %182 = sbr.rel target = $region49
        $region54: #{reverse.6} parent=46 // loop_exit
          _
      $region47: #{reverse.6} parent=38 // pred_fallthru
        _
    $region39: #{reverse.6} parent=1 // pred_fallthru
      _
    %234 = vnop

</llo_original>
